<compile_context>
chip_gen: v7x
topology: tpu7x:2x2x1
jax: 0.10.0
libtpu: 0.0.40
codegen_flags: <defaults>
</compile_context>

<pallas_src>
import jax
import jax.numpy as jnp
from jax.experimental import pallas as pl
from jax.experimental.pallas import tpu as pltpu


def _yolo_head_kernel(x_ref, w_ref, b_ref, m_ref, o_ref):
    """One (batch, spatial-tile) block of the YOLOLayer detection head.

    x_ref: (C_in, hw_tile)      f32   activation slab (native NCHW layout)
    w_ref: (C_out_pad, C_in)    bf16  1x1-conv weight, zero-padded rows
    b_ref: (C_out_pad, 1)       f32   bias column
    m_ref: (C_out_pad, 1)       f32   1.0 where sigmoid is applied, else 0.0
    o_ref: (C_out_pad, hw_tile) f32   output slab
    """
    # Cast to bf16 in VMEM (VPU cast hides under DMA; avoids an HBM pass).
    x = x_ref[...].astype(jnp.bfloat16)
    y = jnp.dot(w_ref[...], x, preferred_element_type=jnp.float32)
    y = y + b_ref[...]                      # lane-broadcast bias
    sig = jax.nn.sigmoid(y)                 # EUP slot; free under the mem bound
    # Selective sigmoid: sigmoid on x,y,obj,cls channels; identity on w,h.
    o_ref[...] = jnp.where(m_ref[...] != 0.0, sig, y)


def _tile_target_from_budget(c_in, c_out_pad, x_itemsize,
                             budget_bytes=20 << 20, cap=2048):
    """Largest 128-multiple spatial tile whose double-buffered x + f32 output
    columns fit in `budget_bytes`."""
    per_lane = 2 * c_in * x_itemsize + 2 * c_out_pad * 4
    t = budget_bytes // per_lane
    t -= t % 128
    return int(max(128, min(t, cap)))


def _pick_hw_tile(hw_pad, target_lanes):
    """Largest 128-multiple divisor of hw_pad that is <= target_lanes and
    leaves >= 2 spatial tiles whenever hw_pad >= 256 (v7x megacore)."""
    k = hw_pad // 128
    best = 1
    for d in range(1, k + 1):
        if k % d != 0 or 128 * d > target_lanes:
            continue
        if k != 1 and k // d < 2:
            continue
        best = max(best, d)
    return 128 * best


def yolo_layer_pallas(x_nchw, weight, bias, n_anchors, n_classes, *,
                      channels_last=True):
    """x_nchw: (B, C_in, H, W) f32; weight: (C_out, C_in); bias: (C_out,).

    Returns (B, n_anchors, H, W, 5 + n_classes) f32 (channels_last=True,
    matching the PyTorch YOLOLayer forward: 1x1 conv -> view -> permute ->
    selective sigmoid), or (B, n_anchors, 5 + n_classes, H, W) if
    channels_last=False (saves one full HBM pass for fused downstream use).
    """
    b, c_in, h, w = x_nchw.shape
    n_ch = 5 + n_classes
    c_out = n_anchors * n_ch
    assert weight.shape == (c_out, c_in) and bias.shape == (c_out,)

    hw = h * w
    hw_pad = ((hw + 127) // 128) * 128       # lane-dense stores, bounded VMEM
    c_out_pad = ((c_out + 7) // 8) * 8       # sublane-aligned (21->24, 255->256)

    x_itemsize = jnp.dtype(x_nchw.dtype).itemsize
    hw_tile = _pick_hw_tile(hw_pad, _tile_target_from_budget(
        c_in, c_out_pad, x_itemsize))
    n_hw_tiles = hw_pad // hw_tile

    # Activation: pure reshape (free); zero-pad spatial only when unaligned.
    x_slab = x_nchw.reshape(b, c_in, hw)
    if hw_pad != hw:
        x_slab = jnp.pad(x_slab, ((0, 0), (0, 0), (0, hw_pad - hw)))

    # Parameters: zero-padded rows; weight in bf16 for the MXU.
    w_mat = jnp.pad(weight.astype(jnp.bfloat16), ((0, c_out_pad - c_out), (0, 0)))
    b_col = jnp.pad(bias.astype(jnp.float32), (0, c_out_pad - c_out)).reshape(
        c_out_pad, 1)

    # Precomputed selective-sigmoid mask: channel-in-anchor index {0,1} or >=4.
    ch = jnp.arange(c_out_pad)
    sel = ((ch % n_ch < 2) | (ch % n_ch >= 4)) & (ch < c_out)
    m_col = sel.astype(jnp.float32).reshape(c_out_pad, 1)

    # Explicit VMEM budget (works on v5e 16 MiB default scoped, v6e 32/128,
    # v7x 32/64): double-buffered x + f32 out + bf16 weight + headroom.
    buf_bytes = (2 * c_in * hw_tile * x_itemsize
                 + 2 * c_out_pad * hw_tile * 4
                 + 2 * c_out_pad * (c_in * 2 + 8))
    vmem_limit = int(min(max(buf_bytes + (8 << 20), 32 << 20), 56 << 20))

    out_slab = pl.pallas_call(
        _yolo_head_kernel,
        out_shape=jax.ShapeDtypeStruct((b, c_out_pad, hw_pad), jnp.float32),
        grid_spec=pltpu.PrefetchScalarGridSpec(
            num_scalar_prefetch=0,
            grid=(b, n_hw_tiles),
            in_specs=[
                pl.BlockSpec((None, c_in, hw_tile), lambda bi, i: (bi, 0, i)),
                pl.BlockSpec((c_out_pad, c_in), lambda bi, i: (0, 0)),
                pl.BlockSpec((c_out_pad, 1), lambda bi, i: (0, 0)),
                pl.BlockSpec((c_out_pad, 1), lambda bi, i: (0, 0)),
            ],
            out_specs=pl.BlockSpec((None, c_out_pad, hw_tile),
                                   lambda bi, i: (bi, 0, i)),
        ),
        compiler_params=pltpu.CompilerParams(
            dimension_semantics=("parallel", "parallel"),
            vmem_limit_bytes=vmem_limit),
    )(x_slab, w_mat, b_col, m_col)

    # Drop channel/spatial padding, then view (+ optional permute) exactly
    # like the PyTorch module.  The permute is a separate HBM-bound XLA pass;
    # pass channels_last=False if the consumer can use NCHW-style layout.
    out = out_slab[:, :c_out, :hw].reshape(b, n_anchors, n_ch, h, w)
    if channels_last:
        out = jnp.transpose(out, (0, 1, 3, 4, 2))
    return out


def _reference(x_nchw, weight, bias, n_anchors, n_classes):
    """Pure-JAX f32 reference mirroring the PyTorch YOLOLayer forward."""
    b, c_in, h, w = x_nchw.shape
    n_ch = 5 + n_classes
    y = jnp.einsum("bchw,oc->bohw", x_nchw, weight) + bias[None, :, None, None]
    y = y.reshape(b, n_anchors, n_ch, h, w)
    y = jnp.transpose(y, (0, 1, 3, 4, 2))
    ch = jnp.arange(n_ch)
    mask = (ch < 2) | (ch >= 4)
    return jnp.where(mask, jax.nn.sigmoid(y), y)


if __name__ == "__main__":
    key = jax.random.PRNGKey(0)
    yolo_jit = jax.jit(yolo_layer_pallas, static_argnums=(3, 4))

    def run_case(case_key, B, C_IN, H, W, n_anchors, n_classes):
        n_ch = 5 + n_classes
        c_out = n_anchors * n_ch
        k1, k2, k3 = jax.random.split(case_key, 3)
        x = jax.random.normal(k1, (B, C_IN, H, W), dtype=jnp.float32)
        # Deterministic synthetic parameters (not a checkpoint load).
        weight = 0.1 * jax.random.normal(k2, (c_out, C_IN), dtype=jnp.float32)
        bias = 0.1 * jax.random.normal(k3, (c_out,), dtype=jnp.float32)

        out = yolo_jit(x, weight, bias, n_anchors, n_classes)
        out = jax.block_until_ready(out)
        ref = _reference(x, weight, bias, n_anchors, n_classes)
        assert out.shape == (B, n_anchors, H, W, n_ch), out.shape
        err = float(jnp.max(jnp.abs(out - ref)))
        assert jnp.allclose(out, ref, atol=2e-2, rtol=2e-2), (
            f"mismatch vs reference, max abs err = {err}")

    k_a, k_b = jax.random.split(key)
    # Case 1: lane-aligned spatial size (H*W = 256 -> two 128-lane tiles).
    run_case(k_a, B=2, C_IN=16, H=16, W=16, n_anchors=3, n_classes=2)
    # Case 2: YOLO-like odd spatial (13x13 -> padded to 256, two tiles) with a
    # COCO-like head (C_out = 255 -> 256) and B=1 (megacore split via spatial
    # tiles), exercising the padding + channel-padding paths.
    run_case(k_b, B=1, C_IN=32, H=13, W=13, n_anchors=3, n_classes=80)

    print("KERNEL_OK")
</pallas_src>

<mosaic_0001>
module attributes {stable_mosaic.version = 11 : i64} {
  func.func @_yolo_head_kernel(%arg0: i32, %arg1: i32, %arg2: memref<1x16x128xf32, #tpu.memory_space<vmem>>, %arg3: memref<24x16xbf16, #tpu.memory_space<vmem>>, %arg4: memref<24x1xf32, #tpu.memory_space<vmem>>, %arg5: memref<24x1xf32, #tpu.memory_space<vmem>>, %arg6: memref<1x24x128xf32, #tpu.memory_space<vmem>>) attributes {dimension_semantics = [#tpu.dimension_semantics<parallel>, #tpu.dimension_semantics<parallel>], iteration_bounds = array<i64: 2, 2>, scalar_prefetch = 0 : i64, scratch_operands = 0 : i64, tpu.core_type = #tpu.core_type<tc>, window_params = [{transform_indices = @transform_0, window_bounds = array<i64: 1, 16, 128>}, {pipeline_mode = #tpu.pipeline_mode<synchronous>, transform_indices = @transform_1, window_bounds = array<i64: 24, 16>}, {pipeline_mode = #tpu.pipeline_mode<synchronous>, transform_indices = @transform_2, window_bounds = array<i64: 24, 1>}, {pipeline_mode = #tpu.pipeline_mode<synchronous>, transform_indices = @transform_3, window_bounds = array<i64: 24, 1>}, {transform_indices = @transform_4, window_bounds = array<i64: 1, 24, 128>}]} {
    %c0 = arith.constant 0 : index
    %c0_0 = arith.constant 0 : index
    %c0_1 = arith.constant 0 : index
    %0 = vector.load %arg2[%c0, %c0_0, %c0_1] : memref<1x16x128xf32, #tpu.memory_space<vmem>>, vector<1x16x128xf32>
    %1 = vector.shape_cast %0 : vector<1x16x128xf32> to vector<16x128xf32>
    %2 = arith.truncf %1 : vector<16x128xf32> to vector<16x128xbf16>
    %c0_2 = arith.constant 0 : index
    %c0_3 = arith.constant 0 : index
    %3 = vector.load %arg3[%c0_2, %c0_3] : memref<24x16xbf16, #tpu.memory_space<vmem>>, vector<24x16xbf16>
    %cst = arith.constant dense<0.000000e+00> : vector<24x128xf32>
    %4 = tpu.matmul %3, %2, %cst {dimension_numbers = #tpu.dot_dimension_numbers<[1], [0], [0], [1], [0, 0, 1, 1], [], []>} : vector<24x16xbf16>, vector<16x128xbf16>, vector<24x128xf32> -> vector<24x128xf32>
    %c0_4 = arith.constant 0 : index
    %c0_5 = arith.constant 0 : index
    %5 = vector.load %arg4[%c0_4, %c0_5] : memref<24x1xf32, #tpu.memory_space<vmem>>, vector<24x1xf32>
    %6 = vector.broadcast %5 : vector<24x1xf32> to vector<24x128xf32>
    %7 = arith.addf %4, %6 : vector<24x128xf32>
    %8 = arith.negf %7 : vector<24x128xf32>
    %9 = math.exp %8 : vector<24x128xf32>
    %cst_6 = arith.constant 1.000000e+00 : f32
    %10 = vector.broadcast %cst_6 : f32 to vector<24x128xf32>
    %11 = arith.addf %10, %9 : vector<24x128xf32>
    %12 = arith.divf %10, %11 : vector<24x128xf32>
    %c0_7 = arith.constant 0 : index
    %c0_8 = arith.constant 0 : index
    %13 = vector.load %arg5[%c0_7, %c0_8] : memref<24x1xf32, #tpu.memory_space<vmem>>, vector<24x1xf32>
    %cst_9 = arith.constant 0.000000e+00 : f32
    %14 = vector.broadcast %cst_9 : f32 to vector<24x1xf32>
    %15 = arith.cmpf one, %13, %14 : vector<24x1xf32>
    %16 = vector.shape_cast %15 : vector<24x1xi1> to vector<24x1xi1>
    %17 = vector.broadcast %16 : vector<24x1xi1> to vector<24x128xi1>
    %18 = arith.select %17, %12, %7 : vector<24x128xi1>, vector<24x128xf32>
    %c0_10 = arith.constant 0 : index
    %c0_11 = arith.constant 0 : index
    %c0_12 = arith.constant 0 : index
    %19 = vector.load %arg6[%c0_10, %c0_11, %c0_12] : memref<1x24x128xf32, #tpu.memory_space<vmem>>, vector<1x24x128xf32>
    %20 = vector.shape_cast %19 : vector<1x24x128xf32> to vector<24x128xf32>
    %21 = vector.shape_cast %18 : vector<24x128xf32> to vector<1x24x128xf32>
    tpu.vector_store %arg6[%c0_10, %c0_11, %c0_12], %21 {strides = array<i32>} : memref<1x24x128xf32, #tpu.memory_space<vmem>>, vector<1x24x128xf32>,
    return
  }
  func.func @transform_0(%arg0: i32, %arg1: i32) -> (i32, i32, i32) {
    %c0_i32 = arith.constant 0 : i32
    %c0_i32_0 = arith.constant 0 : i32
    return %arg0, %c0_i32, %arg1 : i32, i32, i32
  }
  func.func @transform_1(%arg0: i32, %arg1: i32) -> (i32, i32) {
    %c0_i32 = arith.constant 0 : i32
    %c0_i32_0 = arith.constant 0 : i32
    %c0_i32_1 = arith.constant 0 : i32
    return %c0_i32, %c0_i32_0 : i32, i32
  }
  func.func @transform_2(%arg0: i32, %arg1: i32) -> (i32, i32) {
    %c0_i32 = arith.constant 0 : i32
    %c0_i32_0 = arith.constant 0 : i32
    %c0_i32_1 = arith.constant 0 : i32
    return %c0_i32, %c0_i32_0 : i32, i32
  }
  func.func @transform_3(%arg0: i32, %arg1: i32) -> (i32, i32) {
    %c0_i32 = arith.constant 0 : i32
    %c0_i32_0 = arith.constant 0 : i32
    %c0_i32_1 = arith.constant 0 : i32
    return %c0_i32, %c0_i32_0 : i32, i32
  }
  func.func @transform_4(%arg0: i32, %arg1: i32) -> (i32, i32, i32) {
    %c0_i32 = arith.constant 0 : i32
    %c0_i32_0 = arith.constant 0 : i32
    return %arg0, %c0_i32, %arg1 : i32, i32, i32
  }
}

</mosaic_0001>

<llo_original>
// kernel: yolo_layer_pallas.1
$region0: #{yolo_layer_pallas.1}
  #allocation0 [shape = 'u32[]', space=smem, size = 0x4, offset = 0x4, fixed_abs, tag = 'smem constant byte address 0x4 - core index']
  #allocation1 [shape = 'u32[144,128]{1,0:T(1,128)}', space=vmem, size = 0x12000, scoped, tag = 'internal scratch']
  %s0 = inlined_call_operand.vmem [shape: f32[2,16,256], index: 0, kind: input, shape index: {}]
  %s1 = inlined_call_operand.vmem [shape: bf16[24,16], index: 1, kind: input, shape index: {}]
  %s2 = inlined_call_operand.vmem [shape: f32[24,1], index: 2, kind: input, shape index: {}]
  %s3 = inlined_call_operand.vmem [shape: f32[24,1], index: 3, kind: input, shape index: {}]
  %s4 = inlined_call_operand.vmem [shape: f32[2,24,256], index: 4, kind: output, shape index: {}]
  %s5 = sld [smem:[#allocation0]]
  $region121: #{yolo_layer_pallas.1} parent=0
    _
  %s7 = ssub.s32 1, %s5
  %s8 = scalar_select 0, %s7, %s5
  $region1: #{yolo_layer_pallas.1} parent=0
    #allocation2 [shape = 'u8[16384]{0}', space=vmem, size = 0x4000, scoped, tag = 'input window, operand 0']
    #allocation3 [shape = 'u8[24576]{0}', space=vmem, size = 0x6000, scoped, tag = 'output window, operand 0']
    loop: start=0, step=1, limit=6
    $region2: #{yolo_layer_pallas.1} parent=1 // loop_pre_header
      _
    $region3: #{yolo_layer_pallas.1} parent=1 // loop_header
      %s10 = sphi 0, %s14
      %p11 = scmp.ge.s32.totalorder %s10, 6
      %s17 = sphi 0, %s29
      %s18 = sphi 0, %s25
      %s19 = sphi 0, %s17
      %s20 = sphi 0, %s18
      %s21 = sphi 0, %s19
      %s22 = sphi 0, %s20
      %s34 = sphi 0, %s36
      %s37 = sphi 0, %s34
      %s38 = sphi 0, %s37
      %s54 = sphi 0, %s38
      %s58 = sphi 0, %s58
      %s60 = sphi 0, %s58
      %s61 = sphi 0, %s60
      %s75 = sphi 0, %s61
      %s79 = sphi 0, %s79
      %s81 = sphi 0, %s79
      %s82 = sphi 0, %s81
      %s96 = sphi 0, %s82
      %s100 = sphi 0, %s100
      %s102 = sphi 0, %s100
      %s103 = sphi 0, %s102
      %s117 = sphi 0, %s103
      %s125 = sphi 0, %s127
      %s128 = sphi 0, %s125
      %s129 = sphi 0, %s128
      %s145 = sphi 0, %s129
    $region4: #{yolo_layer_pallas.1} parent=1 // loop_header_branch
      %13 = sbr.rel (%p11) target = $region8
    $region5: #{yolo_layer_pallas.1} parent=1 // loop_body
      %s15 = ssub.s32 %s10, 1
      %s16 = ssub.s32 %s10, 2
      %s23 = sadd.s32 1, %s18
      %p24 = scmp.ge.s32.totalorder %s23, 2
      %s25 = scalar_select %p24, 0, %s23
      %s26 = sadd.s32 1, %s17
      %s27 = scalar_select %p24, %s26, %s17
      %p28 = scmp.ge.s32.totalorder %s27, 2
      %s29 = scalar_select %p28, 0, %s27
      %s30 = ssub.s32 %s17, %s29
      %s31 = ssub.s32 %s18, %s25
      %s32 = sor.u32 %s30, %s31
      %p33 = scmp.eq.s32.totalorder %s32, 0
      %s35 = sadd.s32 %s34, 1
      %s36 = scalar_select %p33, %s34, %s35
      %p39 = pneg %p33
      %p40 = scmp.eq.s32.totalorder %s10, 3
      %p41 = por %p39, %p40
      %p42 = scmp.ne.s32.totalorder %s34, %s37
      %p43 = scmp.eq.s32.totalorder %s10, 0
      %p44 = por %p42, %p43
      %p45 = scmp.ne.s32.totalorder %s34, %s37
      %p46 = scmp.eq.s32.totalorder %s15, 3
      %p47 = por %p45, %p46
      %p48 = scmp.ne.s32.totalorder %s37, %s38
      %p49 = scmp.eq.s32.totalorder %s15, 0
      %p50 = por %p48, %p49
      %p51 = scmp.ne.s32.totalorder %s37, %s38
      %p52 = scmp.eq.s32.totalorder %s16, 3
      %p53 = por %p51, %p52
      %p55 = scmp.ne.s32.totalorder %s38, %s54
      %p56 = scmp.eq.s32.totalorder %s16, 0
      %p57 = por %p55, %p56
      %s59 = sadd.s32 %s58, 1
      %p62 = scmp.eq.s32.totalorder %s10, 3
      %p63 = scmp.ne.s32.totalorder %s58, %s60
      %p64 = scmp.eq.s32.totalorder %s10, 0
      %p65 = por %p63, %p64
      %p66 = scmp.ne.s32.totalorder %s58, %s60
      %p67 = scmp.eq.s32.totalorder %s15, 3
      %p68 = por %p66, %p67
      %p69 = scmp.ne.s32.totalorder %s60, %s61
      %p70 = scmp.eq.s32.totalorder %s15, 0
      %p71 = por %p69, %p70
      %p72 = scmp.ne.s32.totalorder %s60, %s61
      %p73 = scmp.eq.s32.totalorder %s16, 3
      %p74 = por %p72, %p73
      %p76 = scmp.ne.s32.totalorder %s61, %s75
      %p77 = scmp.eq.s32.totalorder %s16, 0
      %p78 = por %p76, %p77
      %s80 = sadd.s32 %s79, 1
      %p83 = scmp.eq.s32.totalorder %s10, 3
      %p84 = scmp.ne.s32.totalorder %s79, %s81
      %p85 = scmp.eq.s32.totalorder %s10, 0
      %p86 = por %p84, %p85
      %p87 = scmp.ne.s32.totalorder %s79, %s81
      %p88 = scmp.eq.s32.totalorder %s15, 3
      %p89 = por %p87, %p88
      %p90 = scmp.ne.s32.totalorder %s81, %s82
      %p91 = scmp.eq.s32.totalorder %s15, 0
      %p92 = por %p90, %p91
      %p93 = scmp.ne.s32.totalorder %s81, %s82
      %p94 = scmp.eq.s32.totalorder %s16, 3
      %p95 = por %p93, %p94
      %p97 = scmp.ne.s32.totalorder %s82, %s96
      %p98 = scmp.eq.s32.totalorder %s16, 0
      %p99 = por %p97, %p98
      %s101 = sadd.s32 %s100, 1
      %p104 = scmp.eq.s32.totalorder %s10, 3
      %p105 = scmp.ne.s32.totalorder %s100, %s102
      %p106 = scmp.eq.s32.totalorder %s10, 0
      %p107 = por %p105, %p106
      %p108 = scmp.ne.s32.totalorder %s100, %s102
      %p109 = scmp.eq.s32.totalorder %s15, 3
      %p110 = por %p108, %p109
      %p111 = scmp.ne.s32.totalorder %s102, %s103
      %p112 = scmp.eq.s32.totalorder %s15, 0
      %p113 = por %p111, %p112
      %p114 = scmp.ne.s32.totalorder %s102, %s103
      %p115 = scmp.eq.s32.totalorder %s16, 3
      %p116 = por %p114, %p115
      %p118 = scmp.ne.s32.totalorder %s103, %s117
      %p119 = scmp.eq.s32.totalorder %s16, 0
      %p120 = por %p118, %p119
      %s121 = ssub.s32 %s17, %s29
      %s122 = ssub.s32 %s18, %s25
      %s123 = sor.u32 %s121, %s122
      %p124 = scmp.eq.s32.totalorder %s123, 0
      %s126 = sadd.s32 %s125, 1
      %s127 = scalar_select %p124, %s125, %s126
      %p130 = pneg %p124
      %p131 = scmp.eq.s32.totalorder %s10, 3
      %p132 = por %p130, %p131
      %p133 = scmp.ne.s32.totalorder %s125, %s128
      %p134 = scmp.eq.s32.totalorder %s10, 0
      %p135 = por %p133, %p134
      %p136 = scmp.ne.s32.totalorder %s125, %s128
      %p137 = scmp.eq.s32.totalorder %s15, 3
      %p138 = por %p136, %p137
      %p139 = scmp.ne.s32.totalorder %s128, %s129
      %p140 = scmp.eq.s32.totalorder %s15, 0
      %p141 = por %p139, %p140
      %p142 = scmp.ne.s32.totalorder %s128, %s129
      %p143 = scmp.eq.s32.totalorder %s16, 3
      %p144 = por %p142, %p143
      %p146 = scmp.ne.s32.totalorder %s129, %s145
      %p147 = scmp.eq.s32.totalorder %s16, 0
      %p148 = por %p146, %p147
      %p149 = scmp.le.s32.totalorder 1, %s10
      %p150 = scmp.lt.s32.totalorder %s10, 5
      %p151 = pnand %p149, %p150
      %p152 = pneg %p151
      // Predicated region
      $region9: #{yolo_layer_pallas.1} parent=5 // pred_check
        _
      $region10: #{yolo_layer_pallas.1} parent=5 // pred_check_branch
        %154 = sbr.rel (%p151) target = $region12
      $region11: #{yolo_layer_pallas.1} parent=5 // pred_region
        %s155 = ssub.s32 %s10, 1
        // Predicated region
        $region13: #{yolo_layer_pallas.1} parent=11 // pred_check
          %p156 = pneg %p71
        $region14: #{yolo_layer_pallas.1} parent=11 // pred_check_branch
          %158 = sbr.rel (%p156) target = $region16
        $region15: #{yolo_layer_pallas.1} parent=11 // pred_region
          _
        $region16: #{yolo_layer_pallas.1} parent=11 // pred_fallthru
          _
        // Predicated region
        $region17: #{yolo_layer_pallas.1} parent=11 // pred_check
          %p159 = pneg %p92
        $region18: #{yolo_layer_pallas.1} parent=11 // pred_check_branch
          %161 = sbr.rel (%p159) target = $region20
        $region19: #{yolo_layer_pallas.1} parent=11 // pred_region
          _
        $region20: #{yolo_layer_pallas.1} parent=11 // pred_fallthru
          _
        // Predicated region
        $region21: #{yolo_layer_pallas.1} parent=11 // pred_check
          %p162 = pneg %p113
        $region22: #{yolo_layer_pallas.1} parent=11 // pred_check_branch
          %164 = sbr.rel (%p162) target = $region24
        $region23: #{yolo_layer_pallas.1} parent=11 // pred_region
          _
        $region24: #{yolo_layer_pallas.1} parent=11 // pred_fallthru
          _
      $region12: #{yolo_layer_pallas.1} parent=5 // pred_fallthru
        _
      %p165 = scmp.lt.s32.totalorder %s10, 4
      // Predicated region
      $region25: #{yolo_layer_pallas.1} parent=5 // pred_check
        %p166 = pneg %p165
      $region26: #{yolo_layer_pallas.1} parent=5 // pred_check_branch
        %168 = sbr.rel (%p166) target = $region28
      $region27: #{yolo_layer_pallas.1} parent=5 // pred_region
        // Predicated region
        $region29: #{yolo_layer_pallas.1} parent=27 // pred_check
          %p169 = pneg %p44
        $region30: #{yolo_layer_pallas.1} parent=27 // pred_check_branch
          %171 = sbr.rel (%p169) target = $region32
        $region31: #{yolo_layer_pallas.1} parent=27 // pred_region
          %s172 = sand.u32 %s34, 1
          %s173 = sand.u32 %s34, 1
          %s174 = smul.addr %s173, 16
          %s175 = scalar_lea.vmem [#allocation2], %s174
          %s176 = smul.addr %s17, 4
          %s177 = sadd.s32 %s18, %s176
          %s178 = smul.addr %s177, 8
          %s179 = scalar_lea.vmem %s0, %s178
          // Predicated region
          $region33: #{yolo_layer_pallas.1} parent=31 // pred_check
            _
          $region34: #{yolo_layer_pallas.1} parent=31 // pred_check_branch
            %181 = sbr.rel (0) target = $region36
          $region35: #{yolo_layer_pallas.1} parent=31 // pred_region
            // Predicated region
            $region37: #{yolo_layer_pallas.1} parent=35 // pred_check
              _
            $region38: #{yolo_layer_pallas.1} parent=35 // pred_check_branch
              %183 = sbr.rel (0) target = $region40
            $region39: #{yolo_layer_pallas.1} parent=35 // pred_region
              // Predicated region
              $region52: #{yolo_layer_pallas.1} parent=39 // pred_check
                _
              $region53: #{yolo_layer_pallas.1} parent=39 // pred_check_branch
                %200 = sbr.rel (0) target = $region55
              $region54: #{yolo_layer_pallas.1} parent=39 // pred_region
                loop: start=0, step=1, limit=1
                $region56: #{yolo_layer_pallas.1} parent=54 // loop_pre_header
                  _
                $region57: #{yolo_layer_pallas.1} parent=54 // loop_header
                  %s202 = sphi 0, %s206
                  %p203 = scmp.ge.s32.totalorder %s202, 1
                  %s207 = sphi %s179, %s179
                  %s208 = sphi %s175, %s175
                $region58: #{yolo_layer_pallas.1} parent=54 // loop_header_branch
                  %205 = sbr.rel (%p203) target = $region62
                $region59: #{yolo_layer_pallas.1} parent=54 // loop_body
                  %v209 = vld [vmem:[%s207] sm:$0xff]
                  %210 = vst [vmem:[%s208] sm:$0xff] %v209
                  %v211 = vld [vmem:[%s207 + $0x10] sm:$0xff]
                  %212 = vst [vmem:[%s208 + $0x8] sm:$0xff] %v211
                $region60: #{yolo_layer_pallas.1} parent=54 // loop_footer
                  %s206 = sadd.s32 1, %s202
                $region61: #{yolo_layer_pallas.1} parent=54 // loop_footer_branch
                  %201 = sbr.rel target = $region57
                $region62: #{yolo_layer_pallas.1} parent=54 // loop_exit
                  _
              $region55: #{yolo_layer_pallas.1} parent=39 // pred_fallthru
                _
              // Predicated region
              $region63: #{yolo_layer_pallas.1} parent=39 // pred_check
                _
              $region64: #{yolo_layer_pallas.1} parent=39 // pred_check_branch
                %214 = sbr.rel target = $region66
              $region65: #{yolo_layer_pallas.1} parent=39 // pred_region
                _
              $region66: #{yolo_layer_pallas.1} parent=39 // pred_fallthru
                _
            $region40: #{yolo_layer_pallas.1} parent=35 // pred_fallthru
              _
            // Predicated region
            $region41: #{yolo_layer_pallas.1} parent=35 // pred_check
              _
            $region42: #{yolo_layer_pallas.1} parent=35 // pred_check_branch
              %185 = sbr.rel target = $region44
            $region43: #{yolo_layer_pallas.1} parent=35 // pred_region
              loop: start=0, step=1, limit=1
              $region45: #{yolo_layer_pallas.1} parent=43 // loop_pre_header
                _
              $region46: #{yolo_layer_pallas.1} parent=43 // loop_header
                %s188 = sphi 0, %s192
                %p189 = scmp.ge.s32.totalorder %s188, 1
                %s193 = sphi %s179, %s179
                %s194 = sphi %s175, %s175
              $region47: #{yolo_layer_pallas.1} parent=43 // loop_header_branch
                %191 = sbr.rel (%p189) target = $region51
              $region48: #{yolo_layer_pallas.1} parent=43 // loop_body
                %v195 = vld [vmem:[%s193] sm:$0xff]
                %196 = vst [vmem:[%s194] sm:$0xff] %v195
                %v197 = vld [vmem:[%s193 + $0x10] sm:$0xff]
                %198 = vst [vmem:[%s194 + $0x8] sm:$0xff] %v197
              $region49: #{yolo_layer_pallas.1} parent=43 // loop_footer
                %s192 = sadd.s32 1, %s188
              $region50: #{yolo_layer_pallas.1} parent=43 // loop_footer_branch
                %187 = sbr.rel target = $region46
              $region51: #{yolo_layer_pallas.1} parent=43 // loop_exit
                _
            $region44: #{yolo_layer_pallas.1} parent=35 // pred_fallthru
              _
          $region36: #{yolo_layer_pallas.1} parent=31 // pred_fallthru
            _
          %215 = vnop
        $region32: #{yolo_layer_pallas.1} parent=27 // pred_fallthru
          _
      $region28: #{yolo_layer_pallas.1} parent=5 // pred_fallthru
        _
      %p216 = scmp.le.s32.totalorder 1, %s10
      %p217 = scmp.lt.s32.totalorder %s10, 5
      %p218 = pnand %p216, %p217
      %p219 = pneg %p218
      // Predicated region
      $region67: #{yolo_layer_pallas.1} parent=5 // pred_check
        _
      $region68: #{yolo_layer_pallas.1} parent=5 // pred_check_branch
        %221 = sbr.rel (%p218) target = $region70
      $region69: #{yolo_layer_pallas.1} parent=5 // pred_region
        %s222 = ssub.s32 %s10, 1
        %s223 = sand.u32 %s37, 1
        %s224 = sand.u32 %s37, 1
        %s225 = smul.addr %s224, 16
        %s226 = scalar_lea.vmem [#allocation2], %s225
        // Predicated region
        $region71: #{yolo_layer_pallas.1} parent=69 // pred_check
          %p227 = pneg %p50
        $region72: #{yolo_layer_pallas.1} parent=69 // pred_check_branch
          %229 = sbr.rel (%p227) target = $region74
        $region73: #{yolo_layer_pallas.1} parent=69 // pred_region
          _
        $region74: #{yolo_layer_pallas.1} parent=69 // pred_fallthru
          _
        %s230 = sand.u32 %s37, 1
        %s231 = sand.u32 %s37, 1
        %s232 = smul.addr %s231, 16
        %s233 = scalar_lea.vmem [#allocation2], %s232
        %p234 = pneg %p50
        %p235 = pneg %p47
        %p236 = pneg %p71
        %p237 = pneg %p68
        %p238 = pneg %p92
        %p239 = pneg %p89
        %p240 = pneg %p113
        %p241 = pneg %p110
        %p242 = pneg %p141
        %p243 = pneg %p138
        %s244 = sand.u32 %s128, 1
        %s245 = sand.u32 %s128, 1
        %s246 = smul.addr %s245, 24
        %s247 = scalar_lea.vmem [#allocation3], %s246
        %v249 = vld [vmem:[%s226] sm:$0xff]
        %v250 = vld [vmem:[%s226 + $0x8] sm:$0xff]
        %v251 = vpack.c.bf16 %v250, %v249
        %v252 = vld [vmem:[%s1] sm:$0xf]
        %v253 = vld [vmem:[%s1 + $0x4] sm:$0xf]
        %v254 = vld [vmem:[%s1 + $0x8] sm:$0xf]
        %v255 = vld [vmem:[%s2] sm:$0xff]
        %v256 = vld [vmem:[%s2 + $0x8] sm:$0xff]
        %v257 = vld [vmem:[%s2 + $0x10] sm:$0xff]
        %259 = vset.pattern.permute.xlu0 0
        %260 = vperm.xlu0 %259, %v255
        %v261 = vpop.permute.xlu0 %260
        %264 = vset.pattern.permute.xlu0 0
        %265 = vperm.xlu0 %264, %v256
        %v266 = vpop.permute.xlu0 %265
        %269 = vset.pattern.permute.xlu0 0
        %270 = vperm.xlu0 %269, %v257
        %v271 = vpop.permute.xlu0 %270
        %v276 = vunpack.c.l.b16 %v252
        %v277 = vunpack.c.l.b16 %v253
        %v278 = vunpack.c.l.b16 %v254
        %v279 = vpack.c.b16 %v277, %v276
        %v280 = vpack.c.b16 %v278, %v278
        %vm281 = vcmask 130048
        %v283 = vsel %vm281, %v279, 0
        %v286 = vsel %vm281, %v280, 0
        %288 = vmatprep.subr.bf16.mxu0 0
        %289 = vmatpush1.bf16.msra.mxu0 %v251
        %290 = vmatprep.subr.bf16.mxu0 0
        %291 = vmatpush1.bf16.msra.mxu0 0
        %292 = vmatprep.subr.bf16.mxu0 0
        %293 = vmatpush1.bf16.msra.mxu0 0
        %294 = vmatprep.subr.bf16.mxu0 0
        %295 = vmatpush1.bf16.msra.mxu0 0
        %296 = vmatprep.subr.bf16.mxu0 0
        %297 = vmatpush1.bf16.msra.mxu0 0
        %298 = vmatprep.subr.bf16.mxu0 0
        %299 = vmatpush1.bf16.msra.mxu0 0
        %300 = vmatprep.subr.bf16.mxu0 0
        %301 = vmatpush1.bf16.msra.mxu0 0
        %302 = vmatprep.subr.bf16.mxu0 0
        %303 = vmatpush1.bf16.msra.mxu0 0
        %304 = vmatprep.subr.bf16.mxu0 0
        %305 = vmatpush1.bf16.msra.mxu0 0
        %306 = vmatprep.subr.bf16.mxu0 0
        %307 = vmatpush1.bf16.msra.mxu0 0
        %308 = vmatprep.subr.bf16.mxu0 0
        %309 = vmatpush1.bf16.msra.mxu0 0
        %310 = vmatprep.subr.bf16.mxu0 0
        %311 = vmatpush1.bf16.msra.mxu0 0
        %312 = vmatprep.subr.bf16.mxu0 0
        %313 = vmatpush1.bf16.msra.mxu0 0
        %314 = vmatprep.subr.bf16.mxu0 0
        %315 = vmatpush1.bf16.msra.mxu0 0
        %316 = vmatprep.subr.bf16.mxu0 0
        %317 = vmatpush1.bf16.msra.mxu0 0
        %318 = vmatprep.subr.bf16.mxu0 0
        %319 = vmatpush1.bf16.msra.mxu0 0
        %320 = vmatprep.mubr.bf16.mxu0 0
        %321 = vmatmul.mubr.bf16.gmra.mrb[0].mxu0 %v283
        %v322 = vpop.f32.mrb[0].mxu0
        %v323 = vadd.f32 %v261, %v322
        %v324 = vpop.f32.mrb[0].mxu0
        %v325 = vpop.f32.mrb[0].mxu0
        %v326 = vadd.f32 %v266, %v325
        %v327 = vpop.f32.mrb[0].mxu0
        %328 = vmatprep.mubr.bf16.mxu0 0
        %329 = vmatmul.mubr.bf16.gmra.mrb[0].mxu0 %v286
        %v330 = vpop.f32.mrb[0].mxu0
        %v331 = vadd.f32 %v271, %v330
        %v332 = vpop.f32.mrb[0].mxu0
        %v333 = vpop.f32.mrb[0].mxu0
        %v334 = vpop.f32.mrb[0].mxu0
        %335 = vdwg.mxu0
        %v336 = vxor.u32 %v323, 2147483648
        %v337 = vxor.u32 %v326, 2147483648
        %v338 = vxor.u32 %v331, 2147483648
        %v339 = vmul.f32 %v336, 1.442695
        %v340 = vpow.pop %v339
        %v341 = vmul.f32 %v337, 1.442695
        %v342 = vpow.pop %v341
        %v343 = vmul.f32 %v338, 1.442695
        %v344 = vpow.pop %v343
        %v345 = vadd.f32 %v340, 1.0
        %v346 = vadd.f32 %v342, 1.0
        %v347 = vadd.f32 %v344, 1.0
        %v348 = vrcp.pop %v345
        %v349 = vmul.f32 1.0, %v348
        %v350 = vrcp.pop %v346
        %v351 = vmul.f32 1.0, %v350
        %v352 = vrcp.pop %v347
        %v353 = vmul.f32 1.0, %v352
        %v354 = vld [vmem:[%s3] sm:$0xff]
        %v355 = vld [vmem:[%s3 + $0x8] sm:$0xff]
        %v356 = vld [vmem:[%s3 + $0x10] sm:$0xff]
        %vm357 = vcmp.ne.f32.partialorder %v354, 0.0
        %vm358 = vcmp.ne.f32.partialorder %v355, 0.0
        %vm359 = vcmp.ne.f32.partialorder %v356, 0.0
        %v360 = vsel %vm357, 1, 0
        %v361 = vsel %vm358, 1, 0
        %v362 = vsel %vm359, 1, 0
        %363 = vset.pattern.permute.xlu0 0
        %364 = vperm.xlu0 %363, %v360
        %v365 = vpop.permute.xlu0 %364
        %366 = vset.pattern.permute.xlu0 0
        %367 = vperm.xlu0 %366, %v361
        %v368 = vpop.permute.xlu0 %367
        %369 = vset.pattern.permute.xlu0 0
        %370 = vperm.xlu0 %369, %v362
        %v371 = vpop.permute.xlu0 %370
        %vm372 = vcmp.eq.s32.totalorder %v365, 1
        %vm373 = vcmp.eq.s32.totalorder %v368, 1
        %vm374 = vcmp.eq.s32.totalorder %v371, 1
        %v375 = vsel %vm372, %v349, %v323
        %v376 = vsel %vm373, %v351, %v326
        %v377 = vsel %vm374, %v353, %v331
        %378 = vst [vmem:[%s247] sm:$0xff] %v375
        %379 = vst [vmem:[%s247 + $0x8] sm:$0xff] %v376
        %380 = vst [vmem:[%s247 + $0x10] sm:$0xff] %v377
        %s381 = sand.u32 %s128, 1
        %s382 = sand.u32 %s128, 1
        %s383 = smul.addr %s382, 24
        %s384 = scalar_lea.vmem [#allocation3], %s383
        // Predicated region
        $region75: #{yolo_layer_pallas.1} parent=69 // pred_check
          %p385 = pneg %p138
        $region76: #{yolo_layer_pallas.1} parent=69 // pred_check_branch
          %387 = sbr.rel (%p385) target = $region78
        $region77: #{yolo_layer_pallas.1} parent=69 // pred_region
          %s388 = smul.addr %s19, 6
          %s389 = sadd.s32 %s20, %s388
          %s390 = smul.addr %s389, 8
          %s391 = scalar_lea.vmem %s4, %s390
          // Predicated region
          $region79: #{yolo_layer_pallas.1} parent=77 // pred_check
            _
          $region80: #{yolo_layer_pallas.1} parent=77 // pred_check_branch
            %393 = sbr.rel (0) target = $region82
          $region81: #{yolo_layer_pallas.1} parent=77 // pred_region
            // Predicated region
            $region83: #{yolo_layer_pallas.1} parent=81 // pred_check
              _
            $region84: #{yolo_layer_pallas.1} parent=81 // pred_check_branch
              %395 = sbr.rel (0) target = $region86
            $region85: #{yolo_layer_pallas.1} parent=81 // pred_region
              // Predicated region
              $region98: #{yolo_layer_pallas.1} parent=85 // pred_check
                _
              $region99: #{yolo_layer_pallas.1} parent=85 // pred_check_branch
                %414 = sbr.rel (0) target = $region101
              $region100: #{yolo_layer_pallas.1} parent=85 // pred_region
                loop: start=0, step=1, limit=1
                $region102: #{yolo_layer_pallas.1} parent=100 // loop_pre_header
                  _
                $region103: #{yolo_layer_pallas.1} parent=100 // loop_header
                  %s416 = sphi 0, %s420
                  %p417 = scmp.ge.s32.totalorder %s416, 1
                  %s421 = sphi %s384, %s384
                  %s422 = sphi %s391, %s391
                $region104: #{yolo_layer_pallas.1} parent=100 // loop_header_branch
                  %419 = sbr.rel (%p417) target = $region108
                $region105: #{yolo_layer_pallas.1} parent=100 // loop_body
                  %v423 = vld [vmem:[%s421] sm:$0xff]
                  %424 = vst [vmem:[%s422] sm:$0xff] %v423
                  %v425 = vld [vmem:[%s421 + $0x8] sm:$0xff]
                  %426 = vst [vmem:[%s422 + $0x10] sm:$0xff] %v425
                  %v427 = vld [vmem:[%s421 + $0x10] sm:$0xff]
                  %428 = vst [vmem:[%s422 + $0x20] sm:$0xff] %v427
                $region106: #{yolo_layer_pallas.1} parent=100 // loop_footer
                  %s420 = sadd.s32 1, %s416
                $region107: #{yolo_layer_pallas.1} parent=100 // loop_footer_branch
                  %415 = sbr.rel target = $region103
                $region108: #{yolo_layer_pallas.1} parent=100 // loop_exit
                  _
              $region101: #{yolo_layer_pallas.1} parent=85 // pred_fallthru
                _
              // Predicated region
              $region109: #{yolo_layer_pallas.1} parent=85 // pred_check
                _
              $region110: #{yolo_layer_pallas.1} parent=85 // pred_check_branch
                %430 = sbr.rel target = $region112
              $region111: #{yolo_layer_pallas.1} parent=85 // pred_region
                _
              $region112: #{yolo_layer_pallas.1} parent=85 // pred_fallthru
                _
            $region86: #{yolo_layer_pallas.1} parent=81 // pred_fallthru
              _
            // Predicated region
            $region87: #{yolo_layer_pallas.1} parent=81 // pred_check
              _
            $region88: #{yolo_layer_pallas.1} parent=81 // pred_check_branch
              %397 = sbr.rel target = $region90
            $region89: #{yolo_layer_pallas.1} parent=81 // pred_region
              loop: start=0, step=1, limit=1
              $region91: #{yolo_layer_pallas.1} parent=89 // loop_pre_header
                _
              $region92: #{yolo_layer_pallas.1} parent=89 // loop_header
                %s400 = sphi 0, %s404
                %p401 = scmp.ge.s32.totalorder %s400, 1
                %s405 = sphi %s384, %s384
                %s406 = sphi %s391, %s391
              $region93: #{yolo_layer_pallas.1} parent=89 // loop_header_branch
                %403 = sbr.rel (%p401) target = $region97
              $region94: #{yolo_layer_pallas.1} parent=89 // loop_body
                %v407 = vld [vmem:[%s405] sm:$0xff]
                %408 = vst [vmem:[%s406] sm:$0xff] %v407
                %v409 = vld [vmem:[%s405 + $0x8] sm:$0xff]
                %410 = vst [vmem:[%s406 + $0x10] sm:$0xff] %v409
                %v411 = vld [vmem:[%s405 + $0x10] sm:$0xff]
                %412 = vst [vmem:[%s406 + $0x20] sm:$0xff] %v411
              $region95: #{yolo_layer_pallas.1} parent=89 // loop_footer
                %s404 = sadd.s32 1, %s400
              $region96: #{yolo_layer_pallas.1} parent=89 // loop_footer_branch
                %399 = sbr.rel target = $region92
              $region97: #{yolo_layer_pallas.1} parent=89 // loop_exit
                _
            $region90: #{yolo_layer_pallas.1} parent=81 // pred_fallthru
              _
          $region82: #{yolo_layer_pallas.1} parent=77 // pred_fallthru
            _
          %431 = vnop
        $region78: #{yolo_layer_pallas.1} parent=69 // pred_fallthru
          _
      $region70: #{yolo_layer_pallas.1} parent=5 // pred_fallthru
        _
      %p432 = scmp.le.s32.totalorder 2, %s10
      // Predicated region
      $region113: #{yolo_layer_pallas.1} parent=5 // pred_check
        %p433 = pneg %p432
      $region114: #{yolo_layer_pallas.1} parent=5 // pred_check_branch
        %435 = sbr.rel (%p433) target = $region116
      $region115: #{yolo_layer_pallas.1} parent=5 // pred_region
        %s436 = ssub.s32 %s10, 2
        // Predicated region
        $region117: #{yolo_layer_pallas.1} parent=115 // pred_check
          %p437 = pneg %p144
        $region118: #{yolo_layer_pallas.1} parent=115 // pred_check_branch
          %439 = sbr.rel (%p437) target = $region120
        $region119: #{yolo_layer_pallas.1} parent=115 // pred_region
          %s440 = sand.u32 %s129, 1
          %s441 = sand.u32 %s129, 1
          %s442 = smul.addr %s441, 24
          %s443 = scalar_lea.vmem [#allocation3], %s442
        $region120: #{yolo_layer_pallas.1} parent=115 // pred_fallthru
          _
      $region116: #{yolo_layer_pallas.1} parent=5 // pred_fallthru
        _
    $region6: #{yolo_layer_pallas.1} parent=1 // loop_footer
      %s14 = sadd.s32 1, %s10
    $region7: #{yolo_layer_pallas.1} parent=1 // loop_footer_branch
      %9 = sbr.rel target = $region3
    $region8: #{yolo_layer_pallas.1} parent=1 // loop_exit
      _

</llo_original>
